<compile_context>
chip_gen: v7x
topology: tpu7x:2x2x1
jax: 0.10.0
libtpu: 0.0.40
codegen_flags: <defaults>
</compile_context>

<pallas_src>
import functools
import math

import jax
import jax.numpy as jnp
from jax.experimental import pallas as pl
from jax.experimental.pallas import tpu as pltpu


# Matmul operand dtype fed to the MXU (accumulation is always f32).
# Set to jnp.float32 for bit-closer parity with a fp32 PyTorch reference.
_MXU_DTYPE = jnp.bfloat16
_LN_EPS = 1e-12
# Below v7x's 64 MiB physical VMEM, above the default scoped limits on v5e/v6e.
_VMEM_LIMIT = 48 * 1024 * 1024


# ----------------------------- tiling helpers ------------------------------

def _pick_tile(dim, preferred, align):
    """Largest multiple of `align` that is <= `preferred` and divides `dim`; else full dim."""
    if dim <= preferred:
        return dim
    t = (preferred // align) * align
    while t >= align:
        if dim % t == 0:
            return t
        t -= align
    return dim


def _heads_per_block(num_heads, head_dim):
    """Group heads so each attention block's last dim is lane-dense (>=128) or full H."""
    H = num_heads * head_dim
    if H <= 128 or H % 128 != 0:
        return num_heads
    for hb in range(1, num_heads + 1):
        if num_heads % hb == 0 and (hb * head_dim) % 128 == 0:
            return hb
    return num_heads


# ----------------------------- Pallas kernels ------------------------------

def _matmul_kernel(x_ref, w_ref, b_ref, o_ref, acc_ref, *, activation):
    """Tiled y = act(x @ w + b).  Grid = (M tiles, N tiles, K tiles); K innermost."""
    @pl.when(pl.program_id(2) == 0)
    def _():
        acc_ref[...] = jnp.zeros_like(acc_ref)

    acc_ref[...] += jnp.dot(
        x_ref[...].astype(_MXU_DTYPE),
        w_ref[...].astype(_MXU_DTYPE),
        preferred_element_type=jnp.float32,
    )

    @pl.when(pl.program_id(2) == pl.num_programs(2) - 1)
    def _():
        y = acc_ref[...] + b_ref[...].astype(jnp.float32)
        if activation == "gelu":
            y = jax.nn.gelu(y, approximate=False)  # exact (erf) GELU, matches torch
        o_ref[...] = y.astype(o_ref.dtype)


def _matmul_res_ln_kernel(x_ref, w_ref, b_ref, r_ref, g_ref, bb_ref, o_ref, acc_ref, *, eps):
    """Tiled y = LayerNorm(x @ w + b + residual).  Grid = (M tiles, K tiles); N is full."""
    @pl.when(pl.program_id(1) == 0)
    def _():
        acc_ref[...] = jnp.zeros_like(acc_ref)

    acc_ref[...] += jnp.dot(
        x_ref[...].astype(_MXU_DTYPE),
        w_ref[...].astype(_MXU_DTYPE),
        preferred_element_type=jnp.float32,
    )

    @pl.when(pl.program_id(1) == pl.num_programs(1) - 1)
    def _():
        y = acc_ref[...] + b_ref[...].astype(jnp.float32) + r_ref[...].astype(jnp.float32)
        mean = jnp.mean(y, axis=-1, keepdims=True)
        var = jnp.mean((y - mean) ** 2, axis=-1, keepdims=True)
        norm = (y - mean) * jax.lax.rsqrt(var + eps)
        o_ref[...] = (norm * g_ref[...].astype(jnp.float32)
                      + bb_ref[...].astype(jnp.float32)).astype(o_ref.dtype)


def _mha_kernel(*refs, scale, heads, head_dim, has_mask):
    """One (batch, head-group) slice per grid step.  Blocks are head-slices of (B,S,*H)."""
    if has_mask:
        q_ref, k_ref, v_ref, m_ref, o_ref = refs
    else:
        q_ref, k_ref, v_ref, o_ref = refs
        m_ref = None

    q = q_ref[0]          # (Sq, HB)
    k = k_ref[0]          # (Skv, HB)
    v = v_ref[0]          # (Skv, HB)

    outs = []
    for h in range(heads):                      # small static loop over heads in this block
        sl = slice(h * head_dim, (h + 1) * head_dim)
        qh = (q[:, sl].astype(jnp.float32) * scale).astype(_MXU_DTYPE)
        kh = k[:, sl].astype(_MXU_DTYPE)
        vh = v[:, sl].astype(_MXU_DTYPE)
        s = jnp.dot(qh, kh.T, preferred_element_type=jnp.float32)      # (Sq, Skv)
        if m_ref is not None:
            s = s + m_ref[0].astype(jnp.float32)                       # (Mq, Skv) broadcasts
        s = s - jnp.max(s, axis=-1, keepdims=True)
        p = jnp.exp(s)
        p = p * pl.reciprocal(jnp.sum(p, axis=-1, keepdims=True), approx=True)
        outs.append(jnp.dot(p.astype(_MXU_DTYPE), vh, preferred_element_type=jnp.float32))
    o_ref[0] = jnp.concatenate(outs, axis=-1).astype(o_ref.dtype)


# ----------------------------- kernel wrappers ------------------------------

def linear(x, w, b, activation=None):
    """y = act(x @ w + b).  x: (M,K), w: (K,N), b: (N,).  Tiled over M/N, reduced over K."""
    M, K = x.shape
    N = w.shape[1]
    tm = _pick_tile(M, 256, 8)
    tn = _pick_tile(N, 512, 128)
    tk = _pick_tile(K, 512, 128)
    grid = (M // tm, N // tn, K // tk)
    return pl.pallas_call(
        functools.partial(_matmul_kernel, activation=activation),
        out_shape=jax.ShapeDtypeStruct((M, N), x.dtype),
        grid=grid,
        in_specs=[
            pl.BlockSpec((tm, tk), lambda i, j, k: (i, k)),
            pl.BlockSpec((tk, tn), lambda i, j, k: (k, j)),
            pl.BlockSpec((1, tn), lambda i, j, k: (0, j)),
        ],
        out_specs=pl.BlockSpec((tm, tn), lambda i, j, k: (i, j)),
        scratch_shapes=[pltpu.VMEM((tm, tn), jnp.float32)],
        compiler_params=pltpu.CompilerParams(
            dimension_semantics=("parallel", "parallel", "arbitrary"),
            vmem_limit_bytes=_VMEM_LIMIT),
    )(x, w, b.reshape(1, N))


def linear_residual_layernorm(x, w, b, residual, gamma, beta, eps=_LN_EPS):
    """y = LayerNorm(x @ w + b + residual).  N (hidden) kept whole so LN normalizes a full row."""
    M, K = x.shape
    N = w.shape[1]
    tm = _pick_tile(M, 256, 8)
    tk = _pick_tile(K, 512, 128)
    grid = (M // tm, K // tk)
    return pl.pallas_call(
        functools.partial(_matmul_res_ln_kernel, eps=eps),
        out_shape=jax.ShapeDtypeStruct((M, N), x.dtype),
        grid=grid,
        in_specs=[
            pl.BlockSpec((tm, tk), lambda i, k: (i, k)),
            pl.BlockSpec((tk, N), lambda i, k: (k, 0)),
            pl.BlockSpec((1, N), lambda i, k: (0, 0)),
            pl.BlockSpec((tm, N), lambda i, k: (i, 0)),
            pl.BlockSpec((1, N), lambda i, k: (0, 0)),
            pl.BlockSpec((1, N), lambda i, k: (0, 0)),
        ],
        out_specs=pl.BlockSpec((tm, N), lambda i, k: (i, 0)),
        scratch_shapes=[pltpu.VMEM((tm, N), jnp.float32)],
        compiler_params=pltpu.CompilerParams(
            dimension_semantics=("parallel", "arbitrary"),
            vmem_limit_bytes=_VMEM_LIMIT),
    )(x, w, b.reshape(1, N), residual, gamma.reshape(1, N), beta.reshape(1, N))


def multihead_attention(q_arr, k_arr, v_arr, mask, *, num_heads, head_dim,
                        q_col0, k_col0, v_col0, out_dtype):
    """Multi-head attention with head-aware BlockSpecs (no wrapper transposes).

    q_arr/k_arr/v_arr may be the same fused-projection array; *_col0 are the column offsets
    of the Q/K/V regions within the last dim.  mask: None or additive (B, 1|Sq, Skv) f32.
    Returns the context in (B, Sq, H) layout with head h in columns [h*dH, (h+1)*dH).
    """
    B, Sq, _ = q_arr.shape
    Skv = k_arr.shape[1]
    H = num_heads * head_dim
    hb = _heads_per_block(num_heads, head_dim)     # heads per block -> lane-dense output
    nhb = num_heads // hb
    HB = hb * head_dim
    scale = 1.0 / math.sqrt(head_dim)
    qb, kb, vb = q_col0 // HB, k_col0 // HB, v_col0 // HB

    in_specs = [
        pl.BlockSpec((1, Sq, HB), lambda i, o=qb: (i // nhb, 0, o + i % nhb)),
        pl.BlockSpec((1, Skv, HB), lambda i, o=kb: (i // nhb, 0, o + i % nhb)),
        pl.BlockSpec((1, Skv, HB), lambda i, o=vb: (i // nhb, 0, o + i % nhb)),
    ]
    args = [q_arr, k_arr, v_arr]
    has_mask = mask is not None
    if has_mask:
        Mq = mask.shape[1]
        in_specs.append(pl.BlockSpec((1, Mq, Skv), lambda i: (i // nhb, 0, 0)))
        args.append(mask)

    return pl.pallas_call(
        functools.partial(_mha_kernel, scale=scale, heads=hb, head_dim=head_dim,
                          has_mask=has_mask),
        out_shape=jax.ShapeDtypeStruct((B, Sq, H), out_dtype),
        grid=(B * nhb,),
        in_specs=in_specs,
        out_specs=pl.BlockSpec((1, Sq, HB), lambda i: (i // nhb, 0, i % nhb)),
        compiler_params=pltpu.CompilerParams(
            dimension_semantics=("parallel",),
            vmem_limit_bytes=_VMEM_LIMIT),
    )(*args)


# ----------------------------- decoder layer ------------------------------

def decoder_layer(hidden_states, encoder_hidden_states, encoder_attention_mask, params, num_heads):
    B, Sq, H = hidden_states.shape
    _, Senc, _ = encoder_hidden_states.shape
    dH = H // num_heads
    dtype = hidden_states.dtype

    x2 = hidden_states.reshape(B * Sq, H)
    enc2 = encoder_hidden_states.reshape(B * Senc, H)

    # ---------------- self-attention (no attention mask, matching the reference) ----------
    pa = params["attention"]
    qkv = linear(x2, pa["wqkv"], pa["bqkv"]).reshape(B, Sq, 3 * H)     # fused Q|K|V projection
    ctx = multihead_attention(qkv, qkv, qkv, None,
                              num_heads=num_heads, head_dim=dH,
                              q_col0=0, k_col0=H, v_col0=2 * H, out_dtype=dtype)
    attn_out2 = linear_residual_layernorm(ctx.reshape(B * Sq, H), pa["wo"], pa["bo"],
                                          x2, pa["ln_g"], pa["ln_b"])

    # ---------------- extended encoder attention mask ----------------
    if encoder_attention_mask.ndim == 3:        # (B, Sq, Senc): per-query-row mask, exact
        ext = (1.0 - encoder_attention_mask) * -10000.0
    elif encoder_attention_mask.ndim == 2:      # (B, Senc)
        ext = ((1.0 - encoder_attention_mask) * -10000.0)[:, None, :]
    else:
        raise ValueError("Wrong shape for encoder_attention_mask (shape {})".format(
            encoder_attention_mask.shape))
    ext = ext.astype(jnp.float32)

    # ---------------- cross-attention ----------------
    pc = params["crossattention"]
    q_c = linear(attn_out2, pc["wq"], pc["bq"]).reshape(B, Sq, H)
    kv_c = linear(enc2, pc["wkv"], pc["bkv"]).reshape(B, Senc, 2 * H)  # fused K|V projection
    ctx_c = multihead_attention(q_c, kv_c, kv_c, ext,
                                num_heads=num_heads, head_dim=dH,
                                q_col0=0, k_col0=0, v_col0=H, out_dtype=dtype)
    cross_out2 = linear_residual_layernorm(ctx_c.reshape(B * Sq, H), pc["wo"], pc["bo"],
                                           attn_out2, pc["ln_g"], pc["ln_b"])

    # ---------------- FFN: intermediate (Linear+GELU) + output (Linear+residual+LN) --------
    inter = linear(cross_out2, params["wi"], params["bi"], activation="gelu")
    layer_out2 = linear_residual_layernorm(inter, params["wo2"], params["bo2"],
                                           cross_out2, params["ln_g2"], params["ln_b2"])
    return (layer_out2.reshape(B, Sq, H),)


# ----------------------------- parameter init ------------------------------

def init_params(key, hidden, intermediate):
    def dense(k, fan_in, fan_out):
        return jax.random.normal(k, (fan_in, fan_out), jnp.float32) * 0.02

    keys = jax.random.split(key, 10)

    def self_attn_params(ks):
        wq, wk, wv = dense(ks[0], hidden, hidden), dense(ks[1], hidden, hidden), dense(ks[2], hidden, hidden)
        return {
            # pre-fused Q|K|V weights (concat of the per-projection weights/biases)
            "wqkv": jnp.concatenate([wq, wk, wv], axis=1),
            "bqkv": jnp.zeros((3 * hidden,), jnp.float32),
            "wo": dense(ks[3], hidden, hidden), "bo": jnp.zeros((hidden,), jnp.float32),
            "ln_g": jnp.ones((hidden,), jnp.float32), "ln_b": jnp.zeros((hidden,), jnp.float32),
        }

    def cross_attn_params(ks):
        wk, wv = dense(ks[1], hidden, hidden), dense(ks[2], hidden, hidden)
        return {
            "wq": dense(ks[0], hidden, hidden), "bq": jnp.zeros((hidden,), jnp.float32),
            # pre-fused K|V weights (applied to encoder hidden states)
            "wkv": jnp.concatenate([wk, wv], axis=1),
            "bkv": jnp.zeros((2 * hidden,), jnp.float32),
            "wo": dense(ks[3], hidden, hidden), "bo": jnp.zeros((hidden,), jnp.float32),
            "ln_g": jnp.ones((hidden,), jnp.float32), "ln_b": jnp.zeros((hidden,), jnp.float32),
        }

    return {
        "attention": self_attn_params(keys[0:4]),
        "crossattention": cross_attn_params(keys[4:8]),
        "wi": dense(keys[8], hidden, intermediate),
        "bi": jnp.zeros((intermediate,), jnp.float32),
        "wo2": dense(keys[9], intermediate, hidden),
        "bo2": jnp.zeros((hidden,), jnp.float32),
        "ln_g2": jnp.ones((hidden,), jnp.float32),
        "ln_b2": jnp.zeros((hidden,), jnp.float32),
    }


# ----------------------------- main ------------------------------

if __name__ == "__main__":
    B, S, SENC, HIDDEN, HEADS, INTER = 2, 8, 8, 32, 4, 64

    key = jax.random.PRNGKey(0)
    k_param, k_x, k_enc = jax.random.split(key, 3)

    params = init_params(k_param, HIDDEN, INTER)
    hidden_states = jax.random.normal(k_x, (B, S, HIDDEN), jnp.float32)
    encoder_hidden_states = jax.random.normal(k_enc, (B, SENC, HIDDEN), jnp.float32)
    # 2-D encoder attention mask (1 = attend, 0 = masked)
    encoder_attention_mask = jnp.array(
        [[1, 1, 1, 1, 1, 1, 1, 1],
         [1, 1, 1, 1, 1, 1, 0, 0]], dtype=jnp.float32)

    out = decoder_layer(hidden_states, encoder_hidden_states, encoder_attention_mask,
                        params, HEADS)
    jax.block_until_ready(out)
    assert out[0].shape == (B, S, HIDDEN)
    assert bool(jnp.all(jnp.isfinite(out[0])))
    print("KERNEL_OK")
</pallas_src>

<mosaic_0001>
module attributes {stable_mosaic.version = 11 : i64} {
  func.func @_matmul_kernel(%arg0: i32, %arg1: i32, %arg2: i32, %arg3: memref<16x32xf32, #tpu.memory_space<vmem>>, %arg4: memref<32x96xf32, #tpu.memory_space<vmem>>, %arg5: memref<1x96xf32, #tpu.memory_space<vmem>>, %arg6: memref<16x96xf32, #tpu.memory_space<vmem>>, %arg7: memref<16x96xf32, #tpu.memory_space<vmem>>) attributes {dimension_semantics = [#tpu.dimension_semantics<parallel>, #tpu.dimension_semantics<parallel>, #tpu.dimension_semantics<arbitrary>], iteration_bounds = array<i64: 1, 1, 1>, scalar_prefetch = 0 : i64, scratch_operands = 1 : i64, tpu.core_type = #tpu.core_type<tc>, window_params = [{transform_indices = @transform_0, window_bounds = array<i64: 16, 32>}, {transform_indices = @transform_1, window_bounds = array<i64: 32, 96>}, {transform_indices = @transform_2, window_bounds = array<i64: 1, 96>}, {transform_indices = @transform_3, window_bounds = array<i64: 16, 96>}]} {
    %c0_i32 = arith.constant 0 : i32
    %0 = arith.cmpi eq, %arg2, %c0_i32 : i32
    %1 = arith.extui %0 : i1 to i32
    %c0_i32_0 = arith.constant 0 : i32
    %2 = arith.cmpi ne, %1, %c0_i32_0 : i32
    scf.if %2 {
      %cst_10 = arith.constant 0.000000e+00 : f32
      %14 = vector.broadcast %cst_10 : f32 to vector<16x96xf32>
      %c0_11 = arith.constant 0 : index
      %c0_12 = arith.constant 0 : index
      %15 = vector.load %arg7[%c0_11, %c0_12] : memref<16x96xf32, #tpu.memory_space<vmem>>, vector<16x96xf32>
      tpu.vector_store %arg7[%c0_11, %c0_12], %14 {strides = array<i32>} : memref<16x96xf32, #tpu.memory_space<vmem>>, vector<16x96xf32>,
    } else {
    }
    %c0 = arith.constant 0 : index
    %c0_1 = arith.constant 0 : index
    %3 = vector.load %arg7[%c0, %c0_1] : memref<16x96xf32, #tpu.memory_space<vmem>>, vector<16x96xf32>
    %c0_2 = arith.constant 0 : index
    %c0_3 = arith.constant 0 : index
    %4 = vector.load %arg3[%c0_2, %c0_3] : memref<16x32xf32, #tpu.memory_space<vmem>>, vector<16x32xf32>
    %5 = arith.truncf %4 : vector<16x32xf32> to vector<16x32xbf16>
    %c0_4 = arith.constant 0 : index
    %c0_5 = arith.constant 0 : index
    %6 = vector.load %arg4[%c0_4, %c0_5] : memref<32x96xf32, #tpu.memory_space<vmem>>, vector<32x96xf32>
    %7 = arith.truncf %6 : vector<32x96xf32> to vector<32x96xbf16>
    %cst = arith.constant dense<0.000000e+00> : vector<16x96xf32>
    %8 = tpu.matmul %5, %7, %cst {dimension_numbers = #tpu.dot_dimension_numbers<[1], [0], [0], [1], [0, 0, 1, 1], [], []>} : vector<16x32xbf16>, vector<32x96xbf16>, vector<16x96xf32> -> vector<16x96xf32>
    %9 = arith.addf %3, %8 : vector<16x96xf32>
    %c0_6 = arith.constant 0 : index
    %c0_7 = arith.constant 0 : index
    %10 = vector.load %arg7[%c0_6, %c0_7] : memref<16x96xf32, #tpu.memory_space<vmem>>, vector<16x96xf32>
    tpu.vector_store %arg7[%c0_6, %c0_7], %9 {strides = array<i32>} : memref<16x96xf32, #tpu.memory_space<vmem>>, vector<16x96xf32>,
    %c0_i32_8 = arith.constant 0 : i32
    %11 = arith.cmpi eq, %arg2, %c0_i32_8 : i32
    %12 = arith.extui %11 : i1 to i32
    %c0_i32_9 = arith.constant 0 : i32
    %13 = arith.cmpi ne, %12, %c0_i32_9 : i32
    scf.if %13 {
      %c0_10 = arith.constant 0 : index
      %c0_11 = arith.constant 0 : index
      %14 = vector.load %arg7[%c0_10, %c0_11] : memref<16x96xf32, #tpu.memory_space<vmem>>, vector<16x96xf32>
      %c0_12 = arith.constant 0 : index
      %c0_13 = arith.constant 0 : index
      %15 = vector.load %arg5[%c0_12, %c0_13] : memref<1x96xf32, #tpu.memory_space<vmem>>, vector<1x96xf32>
      %16 = vector.broadcast %15 : vector<1x96xf32> to vector<16x96xf32>
      %17 = arith.addf %14, %16 : vector<16x96xf32>
      %c0_14 = arith.constant 0 : index
      %c0_15 = arith.constant 0 : index
      %18 = vector.load %arg6[%c0_14, %c0_15] : memref<16x96xf32, #tpu.memory_space<vmem>>, vector<16x96xf32>
      tpu.vector_store %arg6[%c0_14, %c0_15], %17 {strides = array<i32>} : memref<16x96xf32, #tpu.memory_space<vmem>>, vector<16x96xf32>,
    } else {
    }
    return
  }
  func.func @transform_0(%arg0: i32, %arg1: i32, %arg2: i32) -> (i32, i32) {
    %c0_i32 = arith.constant 0 : i32
    return %arg0, %arg2 : i32, i32
  }
  func.func @transform_1(%arg0: i32, %arg1: i32, %arg2: i32) -> (i32, i32) {
    %c0_i32 = arith.constant 0 : i32
    return %arg2, %arg1 : i32, i32
  }
  func.func @transform_2(%arg0: i32, %arg1: i32, %arg2: i32) -> (i32, i32) {
    %c0_i32 = arith.constant 0 : i32
    %c0_i32_0 = arith.constant 0 : i32
    return %c0_i32, %arg1 : i32, i32
  }
  func.func @transform_3(%arg0: i32, %arg1: i32, %arg2: i32) -> (i32, i32) {
    %c0_i32 = arith.constant 0 : i32
    return %arg0, %arg1 : i32, i32
  }
}

</mosaic_0001>

<llo_original>
// kernel: tpu_custom_call.1
$region0: #{tpu_custom_call.1}
  #allocation0 [shape = 'u32[]', space=smem, size = 0x4, offset = 0x4, fixed_abs, tag = 'smem constant byte address 0x4 - core index']
  #allocation1 [shape = 'u32[144,128]{1,0:T(1,128)}', space=vmem, size = 0x12000, scoped, tag = 'internal scratch']
  #allocation2 [shape = 'f32[16,96]{1,0:T(8,128)}', space=vmem, size = 0x2000, scoped, tag = 'scratch operand']
  %s0 = inlined_call_operand.hbm [shape: f32[16,32], index: 0, kind: input, shape index: {}]
  %s1 = inlined_call_operand.hbm [shape: f32[32,96], index: 1, kind: input, shape index: {}]
  %s2 = inlined_call_operand.vmem [shape: f32[1,96], index: 2, kind: input, shape index: {}]
  %s3 = inlined_call_operand.hbm [shape: f32[16,96], index: 3, kind: output, shape index: {}]
  %s4 = sld [smem:[#allocation0]]
  $region38: #{tpu_custom_call.1} parent=0
    _
  %s6 = ssub.s32 1, %s4
  %s7 = scalar_select 0, %s6, %s4
  $region1: #{tpu_custom_call.1} parent=0
    #allocation3 [shape = 'u8[8192]{0}', space=vmem, size = 0x2000, scoped, tag = 'input window, operand 0, single buffered']
    #allocation4 [shape = 's32[1]{0}', space=sflag, size = 0x4, scoped, tag = 'scoped memory for tpu_custom_call.1']
    #allocation5 [shape = 's32[1]{0}', space=sflag, size = 0x4, scoped, tag = 'scoped memory for tpu_custom_call.1']
    #allocation6 [shape = 'u8[16384]{0}', space=vmem, size = 0x4000, scoped, tag = 'input window, operand 1, single buffered']
    #allocation7 [shape = 's32[1]{0}', space=sflag, size = 0x4, scoped, tag = 'scoped memory for tpu_custom_call.1']
    #allocation8 [shape = 'u8[8192]{0}', space=vmem, size = 0x2000, scoped, tag = 'output window, operand 0, single buffered']
    %8 = vsyncpa [#allocation4], 0
    %9 = vsyncpa [#allocation7], 0
    %10 = vsyncpa [#allocation5], 0
    // Predicated region
    $region2: #{tpu_custom_call.1} parent=1 // pred_check
      _
    $region3: #{tpu_custom_call.1} parent=1 // pred_check_branch
      %12 = sbr.rel (0) target = $region5
    $region4: #{tpu_custom_call.1} parent=1 // pred_region
      %s14 = ssub.s32 256, 256
      %15 = vsyncadd [#allocation4], %s14
      %s16 = sshll.u32 [#allocation3], 4
      %s17 = int_to_ptr.vmem [resolvable:$true] %s16
      %22 = dma.hbm_to_vmem [thread:$0]  %s0, 256, %s17, [#allocation4], 128, 128, 8
    $region5: #{tpu_custom_call.1} parent=1 // pred_fallthru
      _
    // Predicated region
    $region6: #{tpu_custom_call.1} parent=1 // pred_check
      _
    $region7: #{tpu_custom_call.1} parent=1 // pred_check_branch
      %24 = sbr.rel (0) target = $region9
    $region8: #{tpu_custom_call.1} parent=1 // pred_region
      %s26 = ssub.s32 512, 512
      %27 = vsyncadd [#allocation7], %s26
      %s28 = sshll.u32 [#allocation6], 4
      %s29 = int_to_ptr.vmem [resolvable:$true] %s28
      %34 = dma.hbm_to_vmem [thread:$0]  %s1, 512, %s29, [#allocation7], 128, 128, 8
    $region9: #{tpu_custom_call.1} parent=1 // pred_fallthru
      _
    // Predicated region
    $region10: #{tpu_custom_call.1} parent=1 // pred_check
      _
    $region11: #{tpu_custom_call.1} parent=1 // pred_check_branch
      %36 = sbr.rel (0) target = $region13
    $region12: #{tpu_custom_call.1} parent=1 // pred_region
      _
    $region13: #{tpu_custom_call.1} parent=1 // pred_fallthru
      _
    // Predicated region
    $region14: #{tpu_custom_call.1} parent=1 // pred_check
      _
    $region15: #{tpu_custom_call.1} parent=1 // pred_check_branch
      %38 = sbr.rel (0) target = $region17
    $region16: #{tpu_custom_call.1} parent=1 // pred_region
      %39 = dma.done [#allocation4], 256
    $region17: #{tpu_custom_call.1} parent=1 // pred_fallthru
      _
    // Predicated region
    $region18: #{tpu_custom_call.1} parent=1 // pred_check
      _
    $region19: #{tpu_custom_call.1} parent=1 // pred_check_branch
      %41 = sbr.rel (0) target = $region21
    $region20: #{tpu_custom_call.1} parent=1 // pred_region
      %42 = dma.done [#allocation7], 512
    $region21: #{tpu_custom_call.1} parent=1 // pred_fallthru
      _
    %p44 = scmp.eq.s32.totalorder 0, 0
    // Predicated region
    $region22: #{tpu_custom_call.1} parent=1 // pred_check
      %p45 = pneg %p44
    $region23: #{tpu_custom_call.1} parent=1 // pred_check_branch
      %47 = sbr.rel (%p45) target = $region25
    $region24: #{tpu_custom_call.1} parent=1 // pred_region
      %vm48 = vcmask 785408
      %49 = vst.msk [vmem:[#allocation2] sm:$0xff] %vm48, 0.0
      %50 = vst.msk [vmem:[#allocation2 + $0x8] sm:$0xff] %vm48, 0.0
    $region25: #{tpu_custom_call.1} parent=1 // pred_fallthru
      _
    %v51 = vld [vmem:[#allocation2] sm:$0xff]
    %v52 = vld [vmem:[#allocation2 + $0x8] sm:$0xff]
    %v53 = vld [vmem:[#allocation3] sm:$0xff]
    %v54 = vld [vmem:[#allocation3 + $0x8] sm:$0xff]
    %v55 = vpack.c.bf16 %v54, %v53
    %v56 = vld [vmem:[#allocation6] sm:$0xff]
    %v57 = vld [vmem:[#allocation6 + $0x8] sm:$0xff]
    %v58 = vld [vmem:[#allocation6 + $0x10] sm:$0xff]
    %v59 = vld [vmem:[#allocation6 + $0x18] sm:$0xff]
    %v60 = vpack.c.bf16 %v57, %v56
    %v61 = vpack.c.bf16 %v59, %v58
    %vm62 = vcmask 261120
    %v64 = vsel %vm62, %v55, 0
    %66 = vmatprep.subr.bf16.mxu0 0
    %67 = vmatpush1.bf16.msra.mxu0 %v60
    %68 = vmatprep.subr.bf16.mxu0 0
    %69 = vmatpush1.bf16.msra.mxu0 %v61
    %70 = vmatprep.subr.bf16.mxu0 0
    %71 = vmatpush1.bf16.msra.mxu0 0
    %72 = vmatprep.subr.bf16.mxu0 0
    %73 = vmatpush1.bf16.msra.mxu0 0
    %74 = vmatprep.subr.bf16.mxu0 0
    %75 = vmatpush1.bf16.msra.mxu0 0
    %76 = vmatprep.subr.bf16.mxu0 0
    %77 = vmatpush1.bf16.msra.mxu0 0
    %78 = vmatprep.subr.bf16.mxu0 0
    %79 = vmatpush1.bf16.msra.mxu0 0
    %80 = vmatprep.subr.bf16.mxu0 0
    %81 = vmatpush1.bf16.msra.mxu0 0
    %82 = vmatprep.subr.bf16.mxu0 0
    %83 = vmatpush1.bf16.msra.mxu0 0
    %84 = vmatprep.subr.bf16.mxu0 0
    %85 = vmatpush1.bf16.msra.mxu0 0
    %86 = vmatprep.subr.bf16.mxu0 0
    %87 = vmatpush1.bf16.msra.mxu0 0
    %88 = vmatprep.subr.bf16.mxu0 0
    %89 = vmatpush1.bf16.msra.mxu0 0
    %90 = vmatprep.subr.bf16.mxu0 0
    %91 = vmatpush1.bf16.msra.mxu0 0
    %92 = vmatprep.subr.bf16.mxu0 0
    %93 = vmatpush1.bf16.msra.mxu0 0
    %94 = vmatprep.subr.bf16.mxu0 0
    %95 = vmatpush1.bf16.msra.mxu0 0
    %96 = vmatprep.subr.bf16.mxu0 0
    %97 = vmatpush1.bf16.msra.mxu0 0
    %98 = vmatprep.mubr.bf16.mxu0 0
    %99 = vmatmul.mubr.bf16.gmra.mrb[0].mxu0 %v64
    %v100 = vpop.f32.mrb[0].mxu0
    %v101 = vadd.f32 0.0, %v100
    %v102 = vpop.f32.mrb[0].mxu0
    %v103 = vpop.f32.mrb[0].mxu0
    %v104 = vadd.f32 0.0, %v103
    %v105 = vpop.f32.mrb[0].mxu0
    %106 = vdwg.mxu0
    %v107 = vadd.f32 %v51, %v101
    %v108 = vadd.f32 %v52, %v104
    %vm109 = vcmask 785408
    %110 = vst.msk [vmem:[#allocation2] sm:$0xff] %vm109, %v107
    %111 = vst.msk [vmem:[#allocation2 + $0x8] sm:$0xff] %vm109, %v108
    // Predicated region
    $region26: #{tpu_custom_call.1} parent=1 // pred_check
      %p112 = pneg %p44
    $region27: #{tpu_custom_call.1} parent=1 // pred_check_branch
      %114 = sbr.rel (%p112) target = $region29
    $region28: #{tpu_custom_call.1} parent=1 // pred_region
      %v115 = vld [vmem:[#allocation2] sm:$0xff]
      %v116 = vld [vmem:[#allocation2 + $0x8] sm:$0xff]
      %v117 = vld [vmem:[%s2] sm:$0x1]
      %v119 = vlaneseq
      %v120 = vshrl.u32 %v119, 7
      %v121 = vsub.s32 0, %v120
      %v122 = vrot.slane %v117, %v121
      %v124 = vadd.f32 %v115, %v122
      %v125 = vadd.f32 %v116, %v122
      %126 = vst.msk [vmem:[#allocation8] sm:$0xff] %vm109, %v124
      %127 = vst.msk [vmem:[#allocation8 + $0x8] sm:$0xff] %vm109, %v125
    $region29: #{tpu_custom_call.1} parent=1 // pred_fallthru
      _
    // Predicated region
    $region30: #{tpu_custom_call.1} parent=1 // pred_check
      _
    $region31: #{tpu_custom_call.1} parent=1 // pred_check_branch
      %129 = sbr.rel (0) target = $region33
    $region32: #{tpu_custom_call.1} parent=1 // pred_region
      %s131 = ssub.s32 256, 256
      %132 = vsyncadd [#allocation5], %s131
      %s133 = sshll.u32 [#allocation8], 4
      %s134 = int_to_ptr.vmem [resolvable:$true] %s133
      %139 = dma.vmem_to_hbm [thread:$0]  %s134, 256, %s3, [#allocation5], 128, 128, 8
    $region33: #{tpu_custom_call.1} parent=1 // pred_fallthru
      _
    // Predicated region
    $region34: #{tpu_custom_call.1} parent=1 // pred_check
      _
    $region35: #{tpu_custom_call.1} parent=1 // pred_check_branch
      %141 = sbr.rel (0) target = $region37
    $region36: #{tpu_custom_call.1} parent=1 // pred_region
      %142 = dma.done [#allocation5], 256
    $region37: #{tpu_custom_call.1} parent=1 // pred_fallthru
      _
    %143 = vsyncpa [#allocation4], 1
    %144 = vsyncpa [#allocation7], 1
    %145 = vsyncpa [#allocation5], 1

</llo_original>
